<compile_context>
chip_gen: v6e
topology: v6e:2x2x1
jax: 0.10.0
libtpu: 0.0.40
codegen_flags: <defaults>
</compile_context>

<pallas_src>
import numpy as np
import jax
import jax.numpy as jnp
from jax.experimental import pallas as pl
from jax.experimental.pallas import tpu as pltpu

# ----------------------- synthetic, deterministic config -----------------------
NUM_CLASS = 3
NUM_DIR_BINS = 2
DIR_OFFSET = float(np.pi / 4)
DIR_LIMIT_OFFSET = 0.0
CODE_SIZE = 7                      # ResidualCoder, encode_angle_by_sincos=False
ANCHOR_SIZES = [(3.9, 1.6, 1.56), (0.8, 0.6, 1.73), (1.76, 0.6, 1.73)]
ANCHOR_BOTTOMS = [-1.78, -0.6, -0.6]
ANCHOR_ROTATIONS = [0.0, float(np.pi / 2)]
POINT_CLOUD_RANGE = [0.0, -8.0, -3.0, 8.0, 8.0, 1.0]

TWO_PI = 2.0 * np.pi
PERIOD = TWO_PI / NUM_DIR_BINS

LANES = 128
ANCHOR_FEAT = 8                    # xa ya za dxa dya dza diag (ra - DIR_OFFSET)
MAX_ROW_TILE = 256                 # 256 rows x 128 lanes = 32768 anchors / step


def generate_anchors(H, W):
    """Simplified deterministic stand-in for AnchorGenerator (per-location
    ordering: [class, rotation], matching the conv-channel ordering used below)."""
    x_min, y_min, _, x_max, y_max, _ = POINT_CLOUD_RANGE
    xs = np.linspace(x_min, x_max, W, dtype=np.float32)
    ys = np.linspace(y_min, y_max, H, dtype=np.float32)
    nrot = len(ANCHOR_ROTATIONS)
    anchors = np.zeros((H, W, NUM_CLASS, nrot, 7), np.float32)
    for ci, ((dx, dy, dz), zb) in enumerate(zip(ANCHOR_SIZES, ANCHOR_BOTTOMS)):
        zc = zb + dz / 2.0
        for ri, rot in enumerate(ANCHOR_ROTATIONS):
            anchors[:, :, ci, ri, 0] = xs[None, :]
            anchors[:, :, ci, ri, 1] = ys[:, None]
            anchors[:, :, ci, ri, 2] = zc
            anchors[:, :, ci, ri, 3] = dx
            anchors[:, :, ci, ri, 4] = dy
            anchors[:, :, ci, ri, 5] = dz
            anchors[:, :, ci, ri, 6] = rot
    num_anchors_per_location = NUM_CLASS * nrot
    return anchors.reshape(-1, 7), num_anchors_per_location


def build_anchor_features(anchors):
    """(NA, 7) anchors -> (8, NA) feature rows consumed by the kernel.
    Static per model; compute once at init time in a real pipeline."""
    a = np.asarray(anchors, np.float32)
    feat = np.empty((ANCHOR_FEAT, a.shape[0]), np.float32)
    feat[0:6] = a[:, 0:6].T
    feat[6] = np.sqrt(a[:, 3] ** 2 + a[:, 4] ** 2)      # diag
    feat[7] = a[:, 6] - DIR_OFFSET                      # ra - dir_offset
    return feat


# --------------------------------- Pallas kernel --------------------------------
def decode_kernel(anchor_ref, box_ref, dir_ref, out_ref):
    # anchor_ref: (8, Rt, 128)  rows: xa ya za dxa dya dza diag (ra - DIR_OFFSET)
    # box_ref:    (1, 7, Rt, 128)
    # dir_ref:    (1, NUM_DIR_BINS, Rt, 128)
    # out_ref:    (1, 7, Rt, 128)
    od = out_ref.dtype

    def a_(i):
        return anchor_ref[i, :, :].astype(jnp.float32)

    def t_(i):
        return box_ref[0, i, :, :].astype(jnp.float32)

    def d_(i):
        return dir_ref[0, i, :, :].astype(jnp.float32)

    xa, ya, za = a_(0), a_(1), a_(2)
    dxa, dya, dza = a_(3), a_(4), a_(5)
    diag, ra_off = a_(6), a_(7)

    # ResidualCoder.decode_torch (diag / exp); sqrt is precomputed host-side.
    out_ref[0, 0, :, :] = (t_(0) * diag + xa).astype(od)
    out_ref[0, 1, :, :] = (t_(1) * diag + ya).astype(od)
    out_ref[0, 2, :, :] = (t_(2) * dza + za).astype(od)
    out_ref[0, 3, :, :] = (jnp.exp(t_(3)) * dxa).astype(od)
    out_ref[0, 4, :, :] = (jnp.exp(t_(4)) * dya).astype(od)
    out_ref[0, 5, :, :] = (jnp.exp(t_(5)) * dza).astype(od)

    # argmax over direction bins (first-max on ties, matches torch.max/jnp.argmax)
    if NUM_DIR_BINS == 2:
        lbl = (d_(1) > d_(0)).astype(jnp.float32)
    else:
        best = d_(0)
        lbl = jnp.zeros_like(best)
        for k in range(1, NUM_DIR_BINS):
            dk = d_(k)
            better = dk > best
            best = jnp.where(better, dk, best)
            lbl = jnp.where(better, jnp.float32(k), lbl)

    # limit_period(rg - dir_offset, dir_limit_offset, period);
    # rg - DIR_OFFSET == rt + (ra - DIR_OFFSET) with the latter precomputed.
    # Keep the divide (not *1/PERIOD) to mirror the reference's floor argument.
    val = t_(6) + ra_off
    dir_rot = val - jnp.floor(val / PERIOD + DIR_LIMIT_OFFSET) * PERIOD
    out_ref[0, 6, :, :] = (dir_rot + DIR_OFFSET + PERIOD * lbl).astype(od)


# ----------------------------- tile / grid selection -----------------------------
def _pick_row_tile(r_full, max_rows=MAX_ROW_TILE):
    """Return (row_tile, padded_rows). Rows = NA // 128 lanes."""
    if r_full <= max_rows:
        return r_full, r_full          # full-extent block (exempt from /8 rule)
    max_t = max(8, (max_rows // 8) * 8)
    best = None
    for t in range(8, max_t + 1, 8):
        rp = -(-r_full // t) * t       # ceil to a multiple of t
        key = (rp, -t)                 # minimize padding, then prefer bigger tile
        if best is None or key < best[0]:
            best = (key, t, rp)
    return best[1], best[2]


# --------------------- channel-major decode (zero layout ops) --------------------
def decode_channel_major(anc_feat, box_cm, dir_cm,
                         max_rows=MAX_ROW_TILE, out_dtype=jnp.float32):
    """
    anc_feat: (8, NA)   box_cm: (B, 7, NA)   dir_cm: (B, NUM_DIR_BINS, NA)
    Returns channel-major decoded boxes (B, 7, NA) in out_dtype.
    No layout conversion: use this entry point when the conv permute already
    yields channel-major planes and post-processing consumes them channel-major.
    """
    B, C, NA = box_cm.shape
    assert C == CODE_SIZE and anc_feat.shape == (ANCHOR_FEAT, NA)
    nbins = dir_cm.shape[1]
    assert nbins == NUM_DIR_BINS

    r_full = pl.cdiv(NA, LANES)
    r_tile, R = _pick_row_tile(r_full, max_rows)
    NA_pad = R * LANES

    if NA_pad != NA:
        pad = NA_pad - NA
        anc_feat = jnp.pad(jnp.asarray(anc_feat), ((0, 0), (0, pad)))
        box_cm = jnp.pad(box_cm, ((0, 0), (0, 0), (0, pad)))
        dir_cm = jnp.pad(dir_cm, ((0, 0), (0, 0), (0, pad)))

    # Free reshapes (NA is the contiguous last dim): fold lanes into sublanes.
    anc4 = jnp.asarray(anc_feat).reshape(ANCHOR_FEAT, R, LANES)
    box4 = box_cm.reshape(B, CODE_SIZE, R, LANES)
    dir4 = dir_cm.reshape(B, NUM_DIR_BINS, R, LANES)
    num_tiles = R // r_tile

    out4 = pl.pallas_call(
        decode_kernel,
        out_shape=jax.ShapeDtypeStruct((B, CODE_SIZE, R, LANES), out_dtype),
        grid_spec=pltpu.PrefetchScalarGridSpec(
            num_scalar_prefetch=0,
            # Batch innermost: the anchor block index depends only on j, so the
            # same anchor tile stays resident across the B inner steps.
            grid=(num_tiles, B),
            in_specs=[
                pl.BlockSpec((ANCHOR_FEAT, r_tile, LANES), lambda j, b: (0, j, 0)),
                pl.BlockSpec((1, CODE_SIZE, r_tile, LANES), lambda j, b: (b, 0, j, 0)),
                pl.BlockSpec((1, NUM_DIR_BINS, r_tile, LANES), lambda j, b: (b, 0, j, 0)),
            ],
            out_specs=pl.BlockSpec((1, CODE_SIZE, r_tile, LANES),
                                   lambda j, b: (b, 0, j, 0)),
        ),
        compiler_params=pltpu.CompilerParams(
            dimension_semantics=("parallel", "parallel")),
    )(anc4, box4, dir4)

    out_cm = out4.reshape(B, CODE_SIZE, NA_pad)
    if NA_pad != NA:
        out_cm = out_cm[..., :NA]
    return out_cm


# --------------------------- module-faithful wrapper ------------------------------
def generate_predicted_boxes(cls_preds, box_preds, dir_cls_preds, anchors,
                             max_rows=MAX_ROW_TILE, channel_major_output=False,
                             out_dtype=jnp.float32, anchor_features=None):
    """
    cls_preds:     (B, H, W, na_per_loc * num_class)
    box_preds:     (B, H, W, na_per_loc * 7)         (f32 or bf16)
    dir_cls_preds: (B, H, W, na_per_loc * NUM_DIR_BINS)
    anchors:       (NA, 7) numpy, NA = H*W*na_per_loc
    Returns: batch_cls_preds (B, NA, num_class) f32,
             batch_box_preds (B, NA, 7) (or (B, 7, NA) if channel_major_output)
    """
    B = box_preds.shape[0]
    NA = anchors.shape[0]

    batch_cls_preds = cls_preds.reshape(B, NA, -1).astype(jnp.float32)

    # NHWC -> channel-major.  NOTE (perf): in a production pipeline produce these
    # channel-major at the conv-permute step and call decode_channel_major()
    # directly — these HBM transposes (and the final one below) move more bytes
    # than the decode kernel itself.  They exist only to keep the original
    # module's NHWC-in / (B, NA, 7)-out contract.
    box_cm = box_preds.reshape(B, NA, CODE_SIZE).transpose(0, 2, 1)
    dir_cm = dir_cls_preds.reshape(B, NA, NUM_DIR_BINS).transpose(0, 2, 1)
    if anchor_features is None:
        anchor_features = build_anchor_features(anchors)   # cache per-model in practice
    anc_feat = jnp.asarray(anchor_features)

    out_cm = decode_channel_major(anc_feat, box_cm, dir_cm, max_rows, out_dtype)
    if channel_major_output:
        return batch_cls_preds, out_cm
    return batch_cls_preds, out_cm.transpose(0, 2, 1)       # (B, NA, 7)


# -------------------------------- pure-JAX reference ----------------------------
def reference(cls_preds, box_preds, dir_cls_preds, anchors):
    B = box_preds.shape[0]
    NA = anchors.shape[0]
    bc = cls_preds.reshape(B, NA, -1).astype(jnp.float32)
    t = box_preds.reshape(B, NA, CODE_SIZE).astype(jnp.float32)
    a = jnp.broadcast_to(jnp.asarray(anchors, jnp.float32)[None], (B, NA, 7))
    xa, ya, za, dxa, dya, dza, ra = [a[..., i] for i in range(7)]
    xt, yt, zt, dxt, dyt, dzt, rt = [t[..., i] for i in range(7)]
    diag = jnp.sqrt(dxa ** 2 + dya ** 2)
    xg = xt * diag + xa
    yg = yt * diag + ya
    zg = zt * dza + za
    dxg = jnp.exp(dxt) * dxa
    dyg = jnp.exp(dyt) * dya
    dzg = jnp.exp(dzt) * dza
    rg = rt + ra
    d = dir_cls_preds.reshape(B, NA, NUM_DIR_BINS).astype(jnp.float32)
    lbl = jnp.argmax(d, axis=-1).astype(jnp.float32)
    val = rg - DIR_OFFSET
    dir_rot = val - jnp.floor(val / PERIOD + DIR_LIMIT_OFFSET) * PERIOD
    rg = dir_rot + DIR_OFFSET + PERIOD * lbl
    bb = jnp.stack([xg, yg, zg, dxg, dyg, dzg, rg], axis=-1)
    return bc, bb


# ------------------------------------- main --------------------------------------
if __name__ == "__main__":
    # TODO(synk): training-time branches (target assignment, focal cls loss,
    # smooth-L1 reg loss, dir loss) are not part of this inference forward path.
    cases = [(2, 8, 8),      # NA = 384  -> R=3 rows,  single tile per batch step
             (2, 32, 32)]    # NA = 6144 -> R=48 rows, single tile per batch step
    for (B, H, W) in cases:
        anchors, na_per_loc = generate_anchors(H, W)
        NA = anchors.shape[0]

        key = jax.random.PRNGKey(0)
        k1, k2, k3 = jax.random.split(key, 3)
        cls_preds = jax.random.normal(k1, (B, H, W, na_per_loc * NUM_CLASS), jnp.float32)
        box_preds = 0.1 * jax.random.normal(k2, (B, H, W, na_per_loc * CODE_SIZE), jnp.float32)
        dir_cls_preds = jax.random.normal(k3, (B, H, W, na_per_loc * NUM_DIR_BINS), jnp.float32)

        # f32 path
        batch_cls_preds, batch_box_preds = generate_predicted_boxes(
            cls_preds, box_preds, dir_cls_preds, anchors)
        jax.block_until_ready(batch_box_preds)

        ref_cls, ref_box = reference(cls_preds, box_preds, dir_cls_preds, anchors)
        np.testing.assert_allclose(np.asarray(batch_cls_preds), np.asarray(ref_cls),
                                   rtol=1e-5, atol=1e-5)
        np.testing.assert_allclose(np.asarray(batch_box_preds), np.asarray(ref_box),
                                   rtol=1e-5, atol=1e-5)

    # bf16-input path (conv outputs kept bf16 in HBM; kernel upcasts on load).
    B, H, W = cases[0]
    anchors, na_per_loc = generate_anchors(H, W)
    key = jax.random.PRNGKey(0)
    k1, k2, k3 = jax.random.split(key, 3)
    cls_preds = jax.random.normal(k1, (B, H, W, na_per_loc * NUM_CLASS), jnp.float32)
    box_bf16 = (0.1 * jax.random.normal(k2, (B, H, W, na_per_loc * CODE_SIZE))).astype(jnp.bfloat16)
    dir_bf16 = jax.random.normal(k3, (B, H, W, na_per_loc * NUM_DIR_BINS)).astype(jnp.bfloat16)
    _, bb_bf16 = generate_predicted_boxes(cls_preds, box_bf16, dir_bf16, anchors)
    jax.block_until_ready(bb_bf16)
    _, ref_bf16 = reference(cls_preds, box_bf16, dir_bf16, anchors)
    np.testing.assert_allclose(np.asarray(bb_bf16), np.asarray(ref_bf16),
                               rtol=1e-4, atol=1e-4)

    print("KERNEL_OK")
</pallas_src>

<mosaic_0001>
module attributes {stable_mosaic.version = 11 : i64} {
  func.func @decode_kernel(%arg0: i32, %arg1: i32, %arg2: memref<8x3x128xf32, #tpu.memory_space<vmem>>, %arg3: memref<1x7x3x128xf32, #tpu.memory_space<vmem>>, %arg4: memref<1x2x3x128xf32, #tpu.memory_space<vmem>>, %arg5: memref<1x7x3x128xf32, #tpu.memory_space<vmem>>) attributes {dimension_semantics = [#tpu.dimension_semantics<parallel>, #tpu.dimension_semantics<parallel>], iteration_bounds = array<i64: 1, 2>, scalar_prefetch = 0 : i64, scratch_operands = 0 : i64, tpu.core_type = #tpu.core_type<tc>, window_params = [{transform_indices = @transform_0, window_bounds = array<i64: 8, 3, 128>}, {transform_indices = @transform_1, window_bounds = array<i64: 1, 7, 3, 128>}, {transform_indices = @transform_2, window_bounds = array<i64: 1, 2, 3, 128>}, {transform_indices = @transform_3, window_bounds = array<i64: 1, 7, 3, 128>}]} {
    %c0 = arith.constant 0 : index
    %c0_0 = arith.constant 0 : index
    %c0_1 = arith.constant 0 : index
    %0 = vector.load %arg2[%c0, %c0_0, %c0_1] : memref<8x3x128xf32, #tpu.memory_space<vmem>>, vector<1x3x128xf32>
    %1 = vector.shape_cast %0 : vector<1x3x128xf32> to vector<3x128xf32>
    %c1 = arith.constant 1 : index
    %c0_2 = arith.constant 0 : index
    %c0_3 = arith.constant 0 : index
    %2 = vector.load %arg2[%c1, %c0_2, %c0_3] : memref<8x3x128xf32, #tpu.memory_space<vmem>>, vector<1x3x128xf32>
    %3 = vector.shape_cast %2 : vector<1x3x128xf32> to vector<3x128xf32>
    %c2 = arith.constant 2 : index
    %c0_4 = arith.constant 0 : index
    %c0_5 = arith.constant 0 : index
    %4 = vector.load %arg2[%c2, %c0_4, %c0_5] : memref<8x3x128xf32, #tpu.memory_space<vmem>>, vector<1x3x128xf32>
    %5 = vector.shape_cast %4 : vector<1x3x128xf32> to vector<3x128xf32>
    %c3 = arith.constant 3 : index
    %c0_6 = arith.constant 0 : index
    %c0_7 = arith.constant 0 : index
    %6 = vector.load %arg2[%c3, %c0_6, %c0_7] : memref<8x3x128xf32, #tpu.memory_space<vmem>>, vector<1x3x128xf32>
    %7 = vector.shape_cast %6 : vector<1x3x128xf32> to vector<3x128xf32>
    %c4 = arith.constant 4 : index
    %c0_8 = arith.constant 0 : index
    %c0_9 = arith.constant 0 : index
    %8 = vector.load %arg2[%c4, %c0_8, %c0_9] : memref<8x3x128xf32, #tpu.memory_space<vmem>>, vector<1x3x128xf32>
    %9 = vector.shape_cast %8 : vector<1x3x128xf32> to vector<3x128xf32>
    %c5 = arith.constant 5 : index
    %c0_10 = arith.constant 0 : index
    %c0_11 = arith.constant 0 : index
    %10 = vector.load %arg2[%c5, %c0_10, %c0_11] : memref<8x3x128xf32, #tpu.memory_space<vmem>>, vector<1x3x128xf32>
    %11 = vector.shape_cast %10 : vector<1x3x128xf32> to vector<3x128xf32>
    %c6 = arith.constant 6 : index
    %c0_12 = arith.constant 0 : index
    %c0_13 = arith.constant 0 : index
    %12 = vector.load %arg2[%c6, %c0_12, %c0_13] : memref<8x3x128xf32, #tpu.memory_space<vmem>>, vector<1x3x128xf32>
    %13 = vector.shape_cast %12 : vector<1x3x128xf32> to vector<3x128xf32>
    %c7 = arith.constant 7 : index
    %c0_14 = arith.constant 0 : index
    %c0_15 = arith.constant 0 : index
    %14 = vector.load %arg2[%c7, %c0_14, %c0_15] : memref<8x3x128xf32, #tpu.memory_space<vmem>>, vector<1x3x128xf32>
    %15 = vector.shape_cast %14 : vector<1x3x128xf32> to vector<3x128xf32>
    %c0_16 = arith.constant 0 : index
    %c0_17 = arith.constant 0 : index
    %c0_18 = arith.constant 0 : index
    %c0_19 = arith.constant 0 : index
    %16 = vector.load %arg3[%c0_16, %c0_17, %c0_18, %c0_19] : memref<1x7x3x128xf32, #tpu.memory_space<vmem>>, vector<1x1x3x128xf32>
    %17 = vector.shape_cast %16 : vector<1x1x3x128xf32> to vector<3x128xf32>
    %18 = arith.mulf %17, %13 : vector<3x128xf32>
    %19 = arith.addf %18, %1 : vector<3x128xf32>
    %c0_20 = arith.constant 0 : index
    %c0_21 = arith.constant 0 : index
    %c0_22 = arith.constant 0 : index
    %c0_23 = arith.constant 0 : index
    %20 = vector.load %arg5[%c0_20, %c0_21, %c0_22, %c0_23] : memref<1x7x3x128xf32, #tpu.memory_space<vmem>>, vector<1x1x3x128xf32>
    %21 = vector.shape_cast %20 : vector<1x1x3x128xf32> to vector<3x128xf32>
    %22 = vector.shape_cast %19 : vector<3x128xf32> to vector<1x1x3x128xf32>
    tpu.vector_store %arg5[%c0_20, %c0_21, %c0_22, %c0_23], %22 {strides = array<i32>} : memref<1x7x3x128xf32, #tpu.memory_space<vmem>>, vector<1x1x3x128xf32>,
    %c0_24 = arith.constant 0 : index
    %c1_25 = arith.constant 1 : index
    %c0_26 = arith.constant 0 : index
    %c0_27 = arith.constant 0 : index
    %23 = vector.load %arg3[%c0_24, %c1_25, %c0_26, %c0_27] : memref<1x7x3x128xf32, #tpu.memory_space<vmem>>, vector<1x1x3x128xf32>
    %24 = vector.shape_cast %23 : vector<1x1x3x128xf32> to vector<3x128xf32>
    %25 = arith.mulf %24, %13 : vector<3x128xf32>
    %26 = arith.addf %25, %3 : vector<3x128xf32>
    %c0_28 = arith.constant 0 : index
    %c1_29 = arith.constant 1 : index
    %c0_30 = arith.constant 0 : index
    %c0_31 = arith.constant 0 : index
    %27 = vector.load %arg5[%c0_28, %c1_29, %c0_30, %c0_31] : memref<1x7x3x128xf32, #tpu.memory_space<vmem>>, vector<1x1x3x128xf32>
    %28 = vector.shape_cast %27 : vector<1x1x3x128xf32> to vector<3x128xf32>
    %29 = vector.shape_cast %26 : vector<3x128xf32> to vector<1x1x3x128xf32>
    tpu.vector_store %arg5[%c0_28, %c1_29, %c0_30, %c0_31], %29 {strides = array<i32>} : memref<1x7x3x128xf32, #tpu.memory_space<vmem>>, vector<1x1x3x128xf32>,
    %c0_32 = arith.constant 0 : index
    %c2_33 = arith.constant 2 : index
    %c0_34 = arith.constant 0 : index
    %c0_35 = arith.constant 0 : index
    %30 = vector.load %arg3[%c0_32, %c2_33, %c0_34, %c0_35] : memref<1x7x3x128xf32, #tpu.memory_space<vmem>>, vector<1x1x3x128xf32>
    %31 = vector.shape_cast %30 : vector<1x1x3x128xf32> to vector<3x128xf32>
    %32 = arith.mulf %31, %11 : vector<3x128xf32>
    %33 = arith.addf %32, %5 : vector<3x128xf32>
    %c0_36 = arith.constant 0 : index
    %c2_37 = arith.constant 2 : index
    %c0_38 = arith.constant 0 : index
    %c0_39 = arith.constant 0 : index
    %34 = vector.load %arg5[%c0_36, %c2_37, %c0_38, %c0_39] : memref<1x7x3x128xf32, #tpu.memory_space<vmem>>, vector<1x1x3x128xf32>
    %35 = vector.shape_cast %34 : vector<1x1x3x128xf32> to vector<3x128xf32>
    %36 = vector.shape_cast %33 : vector<3x128xf32> to vector<1x1x3x128xf32>
    tpu.vector_store %arg5[%c0_36, %c2_37, %c0_38, %c0_39], %36 {strides = array<i32>} : memref<1x7x3x128xf32, #tpu.memory_space<vmem>>, vector<1x1x3x128xf32>,
    %c0_40 = arith.constant 0 : index
    %c3_41 = arith.constant 3 : index
    %c0_42 = arith.constant 0 : index
    %c0_43 = arith.constant 0 : index
    %37 = vector.load %arg3[%c0_40, %c3_41, %c0_42, %c0_43] : memref<1x7x3x128xf32, #tpu.memory_space<vmem>>, vector<1x1x3x128xf32>
    %38 = vector.shape_cast %37 : vector<1x1x3x128xf32> to vector<3x128xf32>
    %39 = math.exp %38 : vector<3x128xf32>
    %40 = arith.mulf %39, %7 : vector<3x128xf32>
    %c0_44 = arith.constant 0 : index
    %c3_45 = arith.constant 3 : index
    %c0_46 = arith.constant 0 : index
    %c0_47 = arith.constant 0 : index
    %41 = vector.load %arg5[%c0_44, %c3_45, %c0_46, %c0_47] : memref<1x7x3x128xf32, #tpu.memory_space<vmem>>, vector<1x1x3x128xf32>
    %42 = vector.shape_cast %41 : vector<1x1x3x128xf32> to vector<3x128xf32>
    %43 = vector.shape_cast %40 : vector<3x128xf32> to vector<1x1x3x128xf32>
    tpu.vector_store %arg5[%c0_44, %c3_45, %c0_46, %c0_47], %43 {strides = array<i32>} : memref<1x7x3x128xf32, #tpu.memory_space<vmem>>, vector<1x1x3x128xf32>,
    %c0_48 = arith.constant 0 : index
    %c4_49 = arith.constant 4 : index
    %c0_50 = arith.constant 0 : index
    %c0_51 = arith.constant 0 : index
    %44 = vector.load %arg3[%c0_48, %c4_49, %c0_50, %c0_51] : memref<1x7x3x128xf32, #tpu.memory_space<vmem>>, vector<1x1x3x128xf32>
    %45 = vector.shape_cast %44 : vector<1x1x3x128xf32> to vector<3x128xf32>
    %46 = math.exp %45 : vector<3x128xf32>
    %47 = arith.mulf %46, %9 : vector<3x128xf32>
    %c0_52 = arith.constant 0 : index
    %c4_53 = arith.constant 4 : index
    %c0_54 = arith.constant 0 : index
    %c0_55 = arith.constant 0 : index
    %48 = vector.load %arg5[%c0_52, %c4_53, %c0_54, %c0_55] : memref<1x7x3x128xf32, #tpu.memory_space<vmem>>, vector<1x1x3x128xf32>
    %49 = vector.shape_cast %48 : vector<1x1x3x128xf32> to vector<3x128xf32>
    %50 = vector.shape_cast %47 : vector<3x128xf32> to vector<1x1x3x128xf32>
    tpu.vector_store %arg5[%c0_52, %c4_53, %c0_54, %c0_55], %50 {strides = array<i32>} : memref<1x7x3x128xf32, #tpu.memory_space<vmem>>, vector<1x1x3x128xf32>,
    %c0_56 = arith.constant 0 : index
    %c5_57 = arith.constant 5 : index
    %c0_58 = arith.constant 0 : index
    %c0_59 = arith.constant 0 : index
    %51 = vector.load %arg3[%c0_56, %c5_57, %c0_58, %c0_59] : memref<1x7x3x128xf32, #tpu.memory_space<vmem>>, vector<1x1x3x128xf32>
    %52 = vector.shape_cast %51 : vector<1x1x3x128xf32> to vector<3x128xf32>
    %53 = math.exp %52 : vector<3x128xf32>
    %54 = arith.mulf %53, %11 : vector<3x128xf32>
    %c0_60 = arith.constant 0 : index
    %c5_61 = arith.constant 5 : index
    %c0_62 = arith.constant 0 : index
    %c0_63 = arith.constant 0 : index
    %55 = vector.load %arg5[%c0_60, %c5_61, %c0_62, %c0_63] : memref<1x7x3x128xf32, #tpu.memory_space<vmem>>, vector<1x1x3x128xf32>
    %56 = vector.shape_cast %55 : vector<1x1x3x128xf32> to vector<3x128xf32>
    %57 = vector.shape_cast %54 : vector<3x128xf32> to vector<1x1x3x128xf32>
    tpu.vector_store %arg5[%c0_60, %c5_61, %c0_62, %c0_63], %57 {strides = array<i32>} : memref<1x7x3x128xf32, #tpu.memory_space<vmem>>, vector<1x1x3x128xf32>,
    %c0_64 = arith.constant 0 : index
    %c1_65 = arith.constant 1 : index
    %c0_66 = arith.constant 0 : index
    %c0_67 = arith.constant 0 : index
    %58 = vector.load %arg4[%c0_64, %c1_65, %c0_66, %c0_67] : memref<1x2x3x128xf32, #tpu.memory_space<vmem>>, vector<1x1x3x128xf32>
    %59 = vector.shape_cast %58 : vector<1x1x3x128xf32> to vector<3x128xf32>
    %c0_68 = arith.constant 0 : index
    %c0_69 = arith.constant 0 : index
    %c0_70 = arith.constant 0 : index
    %c0_71 = arith.constant 0 : index
    %60 = vector.load %arg4[%c0_68, %c0_69, %c0_70, %c0_71] : memref<1x2x3x128xf32, #tpu.memory_space<vmem>>, vector<1x1x3x128xf32>
    %61 = vector.shape_cast %60 : vector<1x1x3x128xf32> to vector<3x128xf32>
    %62 = arith.cmpf ogt, %59, %61 : vector<3x128xf32>
    %63 = arith.extui %62 : vector<3x128xi1> to vector<3x128xi32>
    %64 = arith.sitofp %63 : vector<3x128xi32> to vector<3x128xf32>
    %c0_72 = arith.constant 0 : index
    %c6_73 = arith.constant 6 : index
    %c0_74 = arith.constant 0 : index
    %c0_75 = arith.constant 0 : index
    %65 = vector.load %arg3[%c0_72, %c6_73, %c0_74, %c0_75] : memref<1x7x3x128xf32, #tpu.memory_space<vmem>>, vector<1x1x3x128xf32>
    %66 = vector.shape_cast %65 : vector<1x1x3x128xf32> to vector<3x128xf32>
    %67 = arith.addf %66, %15 : vector<3x128xf32>
    %cst = arith.constant 3.14159274 : f32
    %68 = vector.broadcast %cst : f32 to vector<3x128xf32>
    %69 = arith.divf %67, %68 : vector<3x128xf32>
    %cst_76 = arith.constant 0.000000e+00 : f32
    %70 = vector.broadcast %cst_76 : f32 to vector<3x128xf32>
    %71 = arith.addf %69, %70 : vector<3x128xf32>
    %72 = math.floor %71 : vector<3x128xf32>
    %cst_77 = arith.constant 3.14159274 : f32
    %73 = vector.broadcast %cst_77 : f32 to vector<3x128xf32>
    %74 = arith.mulf %72, %73 : vector<3x128xf32>
    %75 = arith.subf %67, %74 : vector<3x128xf32>
    %cst_78 = arith.constant 0.785398185 : f32
    %76 = vector.broadcast %cst_78 : f32 to vector<3x128xf32>
    %77 = arith.addf %75, %76 : vector<3x128xf32>
    %cst_79 = arith.constant 3.14159274 : f32
    %78 = vector.broadcast %cst_79 : f32 to vector<3x128xf32>
    %79 = arith.mulf %78, %64 : vector<3x128xf32>
    %80 = arith.addf %77, %79 : vector<3x128xf32>
    %c0_80 = arith.constant 0 : index
    %c6_81 = arith.constant 6 : index
    %c0_82 = arith.constant 0 : index
    %c0_83 = arith.constant 0 : index
    %81 = vector.load %arg5[%c0_80, %c6_81, %c0_82, %c0_83] : memref<1x7x3x128xf32, #tpu.memory_space<vmem>>, vector<1x1x3x128xf32>
    %82 = vector.shape_cast %81 : vector<1x1x3x128xf32> to vector<3x128xf32>
    %83 = vector.shape_cast %80 : vector<3x128xf32> to vector<1x1x3x128xf32>
    tpu.vector_store %arg5[%c0_80, %c6_81, %c0_82, %c0_83], %83 {strides = array<i32>} : memref<1x7x3x128xf32, #tpu.memory_space<vmem>>, vector<1x1x3x128xf32>,
    return
  }
  func.func @transform_0(%arg0: i32, %arg1: i32) -> (i32, i32, i32) {
    %c0_i32 = arith.constant 0 : i32
    %c0_i32_0 = arith.constant 0 : i32
    %c0_i32_1 = arith.constant 0 : i32
    return %c0_i32, %arg0, %c0_i32_0 : i32, i32, i32
  }
  func.func @transform_1(%arg0: i32, %arg1: i32) -> (i32, i32, i32, i32) {
    %c0_i32 = arith.constant 0 : i32
    %c0_i32_0 = arith.constant 0 : i32
    %c0_i32_1 = arith.constant 0 : i32
    return %arg1, %c0_i32, %arg0, %c0_i32_0 : i32, i32, i32, i32
  }
  func.func @transform_2(%arg0: i32, %arg1: i32) -> (i32, i32, i32, i32) {
    %c0_i32 = arith.constant 0 : i32
    %c0_i32_0 = arith.constant 0 : i32
    %c0_i32_1 = arith.constant 0 : i32
    return %arg1, %c0_i32, %arg0, %c0_i32_0 : i32, i32, i32, i32
  }
  func.func @transform_3(%arg0: i32, %arg1: i32) -> (i32, i32, i32, i32) {
    %c0_i32 = arith.constant 0 : i32
    %c0_i32_0 = arith.constant 0 : i32
    %c0_i32_1 = arith.constant 0 : i32
    return %arg1, %c0_i32, %arg0, %c0_i32_0 : i32, i32, i32, i32
  }
}

</mosaic_0001>

<llo_original>
// kernel: tpu_custom_call.1
$region0: #{tpu_custom_call.1}
  #allocation0 [shape = 'u32[]', space=smem, size = 0x4, offset = 0x4, fixed_abs, tag = 'smem constant byte address 0x4 - core index']
  #allocation1 [shape = 'u32[144,128]{1,0:T(1,128)}', space=vmem, size = 0x12000, scoped, tag = 'internal scratch']
  %s0 = inlined_call_operand.vmem [shape: f32[8,3,128], index: 0, kind: input, shape index: {}]
  %s1 = inlined_call_operand.vmem [shape: f32[2,7,3,128], index: 1, kind: input, shape index: {}]
  %s2 = inlined_call_operand.vmem [shape: f32[2,2,3,128], index: 2, kind: input, shape index: {}]
  %s3 = inlined_call_operand.vmem [shape: f32[2,7,3,128], index: 3, kind: output, shape index: {}]
  %s4 = sld [smem:[#allocation0]]
  $region45: #{tpu_custom_call.1} parent=0
    _
  %s6 = ssub.s32 1, %s4
  %s7 = scalar_select 0, %s6, %s4
  loop: start=0, step=1, limit=4
  $region2: #{tpu_custom_call.1} parent=0 // loop_pre_header
    _
  $region3: #{tpu_custom_call.1} parent=0 // loop_header
    %s9 = sphi 0, %s13
    %p10 = scmp.ge.s32.totalorder %s9, 4
    %s16 = sphi 0, %s28
    %s17 = sphi 0, %s24
    %s18 = sphi 0, %s16
    %s19 = sphi 0, %s17
    %s20 = sphi 0, %s18
    %s21 = sphi 0, %s19
    %s31 = sphi 0, %s33
    %s34 = sphi 0, %s31
    %s35 = sphi 0, %s34
    %s51 = sphi 0, %s35
    %s59 = sphi 0, %s61
    %s62 = sphi 0, %s59
    %s63 = sphi 0, %s62
    %s79 = sphi 0, %s63
    %s87 = sphi 0, %s89
    %s90 = sphi 0, %s87
    %s91 = sphi 0, %s90
    %s107 = sphi 0, %s91
    %s115 = sphi 0, %s117
    %s118 = sphi 0, %s115
    %s119 = sphi 0, %s118
    %s135 = sphi 0, %s119
  $region4: #{tpu_custom_call.1} parent=0 // loop_header_branch
    %12 = sbr.rel (%p10) target = $region8
  $region5: #{tpu_custom_call.1} parent=0 // loop_body
    %s14 = ssub.s32 %s9, 1
    %s15 = ssub.s32 %s9, 2
    %s22 = sadd.s32 1, %s17
    %p23 = scmp.ge.s32.totalorder %s22, 2
    %s24 = scalar_select %p23, 0, %s22
    %s25 = sadd.s32 1, %s16
    %s26 = scalar_select %p23, %s25, %s16
    %p27 = scmp.ge.s32.totalorder %s26, 1
    %s28 = scalar_select %p27, 0, %s26
    %s29 = ssub.s32 %s16, %s28
    %p30 = scmp.eq.s32.totalorder %s29, 0
    %s32 = sadd.s32 %s31, 1
    %s33 = scalar_select %p30, %s31, %s32
    %p36 = pneg %p30
    %p37 = scmp.eq.s32.totalorder %s9, 1
    %p38 = por %p36, %p37
    %p39 = scmp.ne.s32.totalorder %s31, %s34
    %p40 = scmp.eq.s32.totalorder %s9, 0
    %p41 = por %p39, %p40
    %p42 = scmp.ne.s32.totalorder %s31, %s34
    %p43 = scmp.eq.s32.totalorder %s14, 1
    %p44 = por %p42, %p43
    %p45 = scmp.ne.s32.totalorder %s34, %s35
    %p46 = scmp.eq.s32.totalorder %s14, 0
    %p47 = por %p45, %p46
    %p48 = scmp.ne.s32.totalorder %s34, %s35
    %p49 = scmp.eq.s32.totalorder %s15, 1
    %p50 = por %p48, %p49
    %p52 = scmp.ne.s32.totalorder %s35, %s51
    %p53 = scmp.eq.s32.totalorder %s15, 0
    %p54 = por %p52, %p53
    %s55 = ssub.s32 %s17, %s24
    %s56 = ssub.s32 %s16, %s28
    %s57 = sor.u32 %s55, %s56
    %p58 = scmp.eq.s32.totalorder %s57, 0
    %s60 = sadd.s32 %s59, 1
    %s61 = scalar_select %p58, %s59, %s60
    %p64 = pneg %p58
    %p65 = scmp.eq.s32.totalorder %s9, 1
    %p66 = por %p64, %p65
    %p67 = scmp.ne.s32.totalorder %s59, %s62
    %p68 = scmp.eq.s32.totalorder %s9, 0
    %p69 = por %p67, %p68
    %p70 = scmp.ne.s32.totalorder %s59, %s62
    %p71 = scmp.eq.s32.totalorder %s14, 1
    %p72 = por %p70, %p71
    %p73 = scmp.ne.s32.totalorder %s62, %s63
    %p74 = scmp.eq.s32.totalorder %s14, 0
    %p75 = por %p73, %p74
    %p76 = scmp.ne.s32.totalorder %s62, %s63
    %p77 = scmp.eq.s32.totalorder %s15, 1
    %p78 = por %p76, %p77
    %p80 = scmp.ne.s32.totalorder %s63, %s79
    %p81 = scmp.eq.s32.totalorder %s15, 0
    %p82 = por %p80, %p81
    %s83 = ssub.s32 %s17, %s24
    %s84 = ssub.s32 %s16, %s28
    %s85 = sor.u32 %s83, %s84
    %p86 = scmp.eq.s32.totalorder %s85, 0
    %s88 = sadd.s32 %s87, 1
    %s89 = scalar_select %p86, %s87, %s88
    %p92 = pneg %p86
    %p93 = scmp.eq.s32.totalorder %s9, 1
    %p94 = por %p92, %p93
    %p95 = scmp.ne.s32.totalorder %s87, %s90
    %p96 = scmp.eq.s32.totalorder %s9, 0
    %p97 = por %p95, %p96
    %p98 = scmp.ne.s32.totalorder %s87, %s90
    %p99 = scmp.eq.s32.totalorder %s14, 1
    %p100 = por %p98, %p99
    %p101 = scmp.ne.s32.totalorder %s90, %s91
    %p102 = scmp.eq.s32.totalorder %s14, 0
    %p103 = por %p101, %p102
    %p104 = scmp.ne.s32.totalorder %s90, %s91
    %p105 = scmp.eq.s32.totalorder %s15, 1
    %p106 = por %p104, %p105
    %p108 = scmp.ne.s32.totalorder %s91, %s107
    %p109 = scmp.eq.s32.totalorder %s15, 0
    %p110 = por %p108, %p109
    %s111 = ssub.s32 %s17, %s24
    %s112 = ssub.s32 %s16, %s28
    %s113 = sor.u32 %s111, %s112
    %p114 = scmp.eq.s32.totalorder %s113, 0
    %s116 = sadd.s32 %s115, 1
    %s117 = scalar_select %p114, %s115, %s116
    %p120 = pneg %p114
    %p121 = scmp.eq.s32.totalorder %s9, 1
    %p122 = por %p120, %p121
    %p123 = scmp.ne.s32.totalorder %s115, %s118
    %p124 = scmp.eq.s32.totalorder %s9, 0
    %p125 = por %p123, %p124
    %p126 = scmp.ne.s32.totalorder %s115, %s118
    %p127 = scmp.eq.s32.totalorder %s14, 1
    %p128 = por %p126, %p127
    %p129 = scmp.ne.s32.totalorder %s118, %s119
    %p130 = scmp.eq.s32.totalorder %s14, 0
    %p131 = por %p129, %p130
    %p132 = scmp.ne.s32.totalorder %s118, %s119
    %p133 = scmp.eq.s32.totalorder %s15, 1
    %p134 = por %p132, %p133
    %p136 = scmp.ne.s32.totalorder %s119, %s135
    %p137 = scmp.eq.s32.totalorder %s15, 0
    %p138 = por %p136, %p137
    %p139 = scmp.le.s32.totalorder 1, %s9
    %p140 = scmp.lt.s32.totalorder %s9, 3
    %p141 = pnand %p139, %p140
    %p142 = pneg %p141
    // Predicated region
    $region9: #{tpu_custom_call.1} parent=5 // pred_check
      _
    $region10: #{tpu_custom_call.1} parent=5 // pred_check_branch
      %144 = sbr.rel (%p141) target = $region12
    $region11: #{tpu_custom_call.1} parent=5 // pred_region
      %s145 = ssub.s32 %s9, 1
      // Predicated region
      $region13: #{tpu_custom_call.1} parent=11 // pred_check
        %p146 = pneg %p47
      $region14: #{tpu_custom_call.1} parent=11 // pred_check_branch
        %148 = sbr.rel (%p146) target = $region16
      $region15: #{tpu_custom_call.1} parent=11 // pred_region
        %p149 = scmp.lt.s32.totalorder %s18, 0
        %s150 = scalar_select %p149, %s18, 0
        %s151 = smul.addr %s150, 4
        %s152 = scalar_lea.vmem %s0, %s151
      $region16: #{tpu_custom_call.1} parent=11 // pred_fallthru
        _
    $region12: #{tpu_custom_call.1} parent=5 // pred_fallthru
      _
    %p153 = scmp.lt.s32.totalorder %s9, 2
    // Predicated region
    $region17: #{tpu_custom_call.1} parent=5 // pred_check
      %p154 = pneg %p153
    $region18: #{tpu_custom_call.1} parent=5 // pred_check_branch
      %156 = sbr.rel (%p154) target = $region20
    $region19: #{tpu_custom_call.1} parent=5 // pred_region
      // Predicated region
      $region21: #{tpu_custom_call.1} parent=19 // pred_check
        %p157 = pneg %p69
      $region22: #{tpu_custom_call.1} parent=19 // pred_check_branch
        %159 = sbr.rel (%p157) target = $region24
      $region23: #{tpu_custom_call.1} parent=19 // pred_region
        %p160 = scmp.lt.s32.totalorder %s17, 1
        %s161 = scalar_select %p160, %s17, 1
        %p162 = scmp.lt.s32.totalorder %s16, 0
        %s163 = scalar_select %p162, %s16, 0
        %s164 = smul.addr %s161, 7
        %s165 = sadd.s32 %s163, %s164
        %s166 = smul.addr %s165, 4
        %s167 = scalar_lea.vmem %s1, %s166
      $region24: #{tpu_custom_call.1} parent=19 // pred_fallthru
        _
      // Predicated region
      $region25: #{tpu_custom_call.1} parent=19 // pred_check
        %p168 = pneg %p97
      $region26: #{tpu_custom_call.1} parent=19 // pred_check_branch
        %170 = sbr.rel (%p168) target = $region28
      $region27: #{tpu_custom_call.1} parent=19 // pred_region
        %p171 = scmp.lt.s32.totalorder %s17, 1
        %s172 = scalar_select %p171, %s17, 1
        %p173 = scmp.lt.s32.totalorder %s16, 0
        %s174 = scalar_select %p173, %s16, 0
        %s175 = smul.addr %s172, 2
        %s176 = sadd.s32 %s174, %s175
        %s177 = smul.addr %s176, 4
        %s178 = scalar_lea.vmem %s2, %s177
      $region28: #{tpu_custom_call.1} parent=19 // pred_fallthru
        _
    $region20: #{tpu_custom_call.1} parent=5 // pred_fallthru
      _
    %p179 = scmp.le.s32.totalorder 1, %s9
    %p180 = scmp.lt.s32.totalorder %s9, 3
    %p181 = pnand %p179, %p180
    %p182 = pneg %p181
    // Predicated region
    $region29: #{tpu_custom_call.1} parent=5 // pred_check
      _
    $region30: #{tpu_custom_call.1} parent=5 // pred_check_branch
      %184 = sbr.rel (%p181) target = $region32
    $region31: #{tpu_custom_call.1} parent=5 // pred_region
      %s185 = ssub.s32 %s9, 1
      %p186 = scmp.lt.s32.totalorder %s18, 0
      %s187 = scalar_select %p186, %s18, 0
      %s188 = smul.addr %s187, 4
      %s189 = scalar_lea.vmem %s0, %s188
      %p190 = pneg %p47
      %p191 = pneg %p44
      %p192 = scmp.lt.s32.totalorder %s19, 1
      %s193 = scalar_select %p192, %s19, 1
      %p194 = scmp.lt.s32.totalorder %s18, 0
      %s195 = scalar_select %p194, %s18, 0
      %s196 = smul.addr %s193, 7
      %s197 = sadd.s32 %s195, %s196
      %s198 = smul.addr %s197, 4
      %s199 = scalar_lea.vmem %s1, %s198
      %p200 = pneg %p75
      %p201 = pneg %p72
      %p202 = scmp.lt.s32.totalorder %s19, 1
      %s203 = scalar_select %p202, %s19, 1
      %p204 = scmp.lt.s32.totalorder %s18, 0
      %s205 = scalar_select %p204, %s18, 0
      %s206 = smul.addr %s203, 2
      %s207 = sadd.s32 %s205, %s206
      %s208 = smul.addr %s207, 4
      %s209 = scalar_lea.vmem %s2, %s208
      %p210 = pneg %p103
      %p211 = pneg %p100
      %p212 = pneg %p131
      %p213 = pneg %p128
      %p214 = scmp.lt.s32.totalorder %s19, 1
      %s215 = scalar_select %p214, %s19, 1
      %p216 = scmp.lt.s32.totalorder %s18, 0
      %s217 = scalar_select %p216, %s18, 0
      %s218 = smul.addr %s215, 7
      %s219 = sadd.s32 %s217, %s218
      %s220 = smul.addr %s219, 4
      %s221 = scalar_lea.vmem %s3, %s220
      %p222 = scmp.lt.s32.totalorder %s18, 0
      %s223 = scalar_select %p222, %s18, 0
      %s224 = smul.addr %s223, 4
      %s225 = scalar_lea.vmem %s0, %s224
      %p226 = scmp.lt.s32.totalorder %s19, 1
      %s227 = scalar_select %p226, %s19, 1
      %p228 = scmp.lt.s32.totalorder %s18, 0
      %s229 = scalar_select %p228, %s18, 0
      %s230 = smul.addr %s227, 7
      %s231 = sadd.s32 %s229, %s230
      %s232 = smul.addr %s231, 4
      %s233 = scalar_lea.vmem %s1, %s232
      %p234 = scmp.lt.s32.totalorder %s19, 1
      %s235 = scalar_select %p234, %s19, 1
      %p236 = scmp.lt.s32.totalorder %s18, 0
      %s237 = scalar_select %p236, %s18, 0
      %s238 = smul.addr %s235, 2
      %s239 = sadd.s32 %s237, %s238
      %s240 = smul.addr %s239, 4
      %s241 = scalar_lea.vmem %s2, %s240
      %p242 = scmp.lt.s32.totalorder %s19, 1
      %s243 = scalar_select %p242, %s19, 1
      %p244 = scmp.lt.s32.totalorder %s18, 0
      %s245 = scalar_select %p244, %s18, 0
      %s246 = smul.addr %s243, 7
      %s247 = sadd.s32 %s245, %s246
      %s248 = smul.addr %s247, 4
      %s249 = scalar_lea.vmem %s3, %s248
      %v250 = vld [vmem:[%s225] sm:$0x7]
      %s251 = scalar_lea.vmem %s225, 4
      %v252 = vld [vmem:[%s251] sm:$0x7]
      %s253 = scalar_lea.vmem %s225, 8
      %v254 = vld [vmem:[%s253] sm:$0x7]
      %s255 = scalar_lea.vmem %s225, 12
      %v256 = vld [vmem:[%s255] sm:$0x7]
      %s257 = scalar_lea.vmem %s225, 16
      %v258 = vld [vmem:[%s257] sm:$0x7]
      %s259 = scalar_lea.vmem %s225, 20
      %v260 = vld [vmem:[%s259] sm:$0x7]
      %s261 = scalar_lea.vmem %s225, 24
      %v262 = vld [vmem:[%s261] sm:$0x7]
      %s263 = scalar_lea.vmem %s225, 28
      %v264 = vld [vmem:[%s263] sm:$0x7]
      %v265 = vld [vmem:[%s233] sm:$0x7]
      %v266 = vmul.f32 %v265, %v262
      %v267 = vadd.f32 %v266, %v250
      %268 = vst [vmem:[%s249] sm:$0x7] %v267
      %s269 = scalar_lea.vmem %s233, 4
      %v270 = vld [vmem:[%s269] sm:$0x7]
      %v271 = vmul.f32 %v270, %v262
      %v272 = vadd.f32 %v271, %v252
      %s273 = scalar_lea.vmem %s249, 4
      %274 = vst [vmem:[%s273] sm:$0x7] %v272
      %s275 = scalar_lea.vmem %s233, 8
      %v276 = vld [vmem:[%s275] sm:$0x7]
      %v277 = vmul.f32 %v276, %v260
      %v278 = vadd.f32 %v277, %v254
      %s279 = scalar_lea.vmem %s249, 8
      %280 = vst [vmem:[%s279] sm:$0x7] %v278
      %s281 = scalar_lea.vmem %s233, 12
      %v282 = vld [vmem:[%s281] sm:$0x7]
      %v283 = vmul.f32 %v282, 1.442695
      %v284 = vpow.pop %v283
      %v285 = vmul.f32 %v284, %v256
      %s286 = scalar_lea.vmem %s249, 12
      %287 = vst [vmem:[%s286] sm:$0x7] %v285
      %s288 = scalar_lea.vmem %s233, 16
      %v289 = vld [vmem:[%s288] sm:$0x7]
      %v290 = vmul.f32 %v289, 1.442695
      %v291 = vpow.pop %v290
      %v292 = vmul.f32 %v291, %v258
      %s293 = scalar_lea.vmem %s249, 16
      %294 = vst [vmem:[%s293] sm:$0x7] %v292
      %s295 = scalar_lea.vmem %s233, 20
      %v296 = vld [vmem:[%s295] sm:$0x7]
      %v297 = vmul.f32 %v296, 1.442695
      %v298 = vpow.pop %v297
      %v299 = vmul.f32 %v298, %v260
      %s300 = scalar_lea.vmem %s249, 20
      %301 = vst [vmem:[%s300] sm:$0x7] %v299
      %s302 = scalar_lea.vmem %s241, 4
      %v303 = vld [vmem:[%s302] sm:$0x7]
      %v304 = vld [vmem:[%s241] sm:$0x7]
      %vm305 = vcmp.gt.f32.partialorder %v303, %v304
      %v306 = vsel %vm305, 1, 0
      %v307 = vcvt.s32.f32 %v306
      %s308 = scalar_lea.vmem %s233, 24
      %v309 = vld [vmem:[%s308] sm:$0x7]
      %v310 = vadd.f32 %v309, %v264
      %v311 = vrcp.pop 3.1415927
      %v312 = vmul.f32 %v310, %v311
      %v313 = vadd.f32 %v312, 0.0
      %v314 = vfloor.f32 %v313
      %v315 = vmul.f32 %v314, 3.1415927
      %v316 = vsub.f32 %v310, %v315
      %v317 = vadd.f32 %v316, 0.7853982
      %v318 = vmul.f32 %v307, 3.1415927
      %v319 = vadd.f32 %v317, %v318
      %s320 = scalar_lea.vmem %s249, 24
      %321 = vst [vmem:[%s320] sm:$0x7] %v319
      %p322 = scmp.lt.s32.totalorder %s19, 1
      %s323 = scalar_select %p322, %s19, 1
      %p324 = scmp.lt.s32.totalorder %s18, 0
      %s325 = scalar_select %p324, %s18, 0
      %s326 = smul.addr %s323, 7
      %s327 = sadd.s32 %s325, %s326
      %s328 = smul.addr %s327, 4
      %s329 = scalar_lea.vmem %s3, %s328
      // Predicated region
      $region33: #{tpu_custom_call.1} parent=31 // pred_check
        %p330 = pneg %p128
      $region34: #{tpu_custom_call.1} parent=31 // pred_check_branch
        %332 = sbr.rel (%p330) target = $region36
      $region35: #{tpu_custom_call.1} parent=31 // pred_region
        _
      $region36: #{tpu_custom_call.1} parent=31 // pred_fallthru
        _
    $region32: #{tpu_custom_call.1} parent=5 // pred_fallthru
      _
    %p333 = scmp.le.s32.totalorder 2, %s9
    // Predicated region
    $region37: #{tpu_custom_call.1} parent=5 // pred_check
      %p334 = pneg %p333
    $region38: #{tpu_custom_call.1} parent=5 // pred_check_branch
      %336 = sbr.rel (%p334) target = $region40
    $region39: #{tpu_custom_call.1} parent=5 // pred_region
      %s337 = ssub.s32 %s9, 2
      // Predicated region
      $region41: #{tpu_custom_call.1} parent=39 // pred_check
        %p338 = pneg %p134
      $region42: #{tpu_custom_call.1} parent=39 // pred_check_branch
        %340 = sbr.rel (%p338) target = $region44
      $region43: #{tpu_custom_call.1} parent=39 // pred_region
        %p341 = scmp.lt.s32.totalorder %s21, 1
        %s342 = scalar_select %p341, %s21, 1
        %p343 = scmp.lt.s32.totalorder %s20, 0
        %s344 = scalar_select %p343, %s20, 0
        %s345 = smul.addr %s342, 7
        %s346 = sadd.s32 %s344, %s345
        %s347 = smul.addr %s346, 4
        %s348 = scalar_lea.vmem %s3, %s347
      $region44: #{tpu_custom_call.1} parent=39 // pred_fallthru
        _
    $region40: #{tpu_custom_call.1} parent=5 // pred_fallthru
      _
  $region6: #{tpu_custom_call.1} parent=0 // loop_footer
    %s13 = sadd.s32 1, %s9
  $region7: #{tpu_custom_call.1} parent=0 // loop_footer_branch
    %8 = sbr.rel target = $region3
  $region8: #{tpu_custom_call.1} parent=0 // loop_exit
    _

</llo_original>
